<compile_context>
chip_gen: v6e
topology: v6e:2x2x1
jax: 0.10.0
libtpu: 0.0.40
codegen_flags: <defaults>
</compile_context>

<pallas_src>
import functools

import jax
import jax.numpy as jnp
from jax.experimental import pallas as pl
from jax.experimental.pallas import tpu as pltpu


def _online_update(x, j, m_sc, s_sc, *, V: int, tv: int, mask_tail: bool):
    """One online-logsumexp step over a (tm, tv) block of logits."""
    if mask_tail:
        gcol = j * tv + jax.lax.broadcasted_iota(jnp.int32, x.shape, 1)
        col_ok = gcol < V
        xf = x.astype(jnp.float32)
        blk_max = jnp.max(jnp.where(col_ok, xf, -jnp.inf), axis=-1, keepdims=True)
        m_new = jnp.maximum(m_sc[...], blk_max)
        ez = jnp.where(col_ok, jnp.exp(xf - m_new), 0.0)
    else:
        # Max on the raw streamed dtype (order preserved under f32 cast);
        # only the exp argument is promoted to f32.
        blk_max = jnp.max(x, axis=-1, keepdims=True).astype(jnp.float32)
        m_new = jnp.maximum(m_sc[...], blk_max)
        ez = jnp.exp(x.astype(jnp.float32) - m_new)
    alpha = jnp.exp(m_sc[...] - m_new)
    s_sc[...] = alpha * s_sc[...] + jnp.sum(ez, axis=-1, keepdims=True)
    m_sc[...] = m_new


def _lse_kernel(x_ref, out_ref, m_sc, s_sc, *, V: int, tv: int):
    j = pl.program_id(1)              # vocab-block index ("arbitrary", reduction)
    nv = pl.num_programs(1)

    @pl.when(j == 0)
    def _():
        m_sc[...] = jnp.full_like(m_sc, -jnp.inf)
        s_sc[...] = jnp.zeros_like(s_sc)

    x = x_ref[...]                    # native dtype (tm, tv), no eager upcast

    if V % tv == 0:
        # Static mask-free path: no iota / compare / select anywhere.
        _online_update(x, j, m_sc, s_sc, V=V, tv=tv, mask_tail=False)
    else:
        # Only the last vocab block pays for the ragged-tail mask.
        @pl.when(j < nv - 1)
        def _():
            _online_update(x, j, m_sc, s_sc, V=V, tv=tv, mask_tail=False)

        @pl.when(j == nv - 1)
        def _():
            _online_update(x, j, m_sc, s_sc, V=V, tv=tv, mask_tail=True)

    @pl.when(j == nv - 1)
    def _():
        # Per-row logsumexp.  Ragged row-tail rows (past M) hold garbage but are
        # row-independent and their out-of-bounds writes are discarded by Pallas.
        out_ref[...] = (m_sc[...] + jnp.log(s_sc[...])).astype(out_ref.dtype)


def _pick_tiles(M: int, V: int, dtype_bytes: int):
    """Derive (tm, tv, vmem_limit_bytes) from the generation's VMEM capacity."""
    try:
        vmem_cap = int(pltpu.get_tpu_info().vmem_capacity_bytes)
    except Exception:  # pragma: no cover - conservative fallback
        vmem_cap = 64 * 1024 * 1024

    if vmem_cap >= 96 * 1024 * 1024:          # v5e / v6e: 128 MiB physical
        total_budget = 72 * 1024 * 1024
        vmem_limit = 96 * 1024 * 1024
    else:                                      # v7x: 64 MiB physical
        total_budget = 36 * 1024 * 1024
        vmem_limit = 48 * 1024 * 1024

    # Per-element VMEM cost of one logits tile:
    #   2 double-buffered native-dtype copies + ~2 f32-sized temporaries
    #   (the f32 cast feeding exp, plus ez) that the compiler materializes.
    per_elem = 2 * dtype_bytes + 2 * 4
    max_tile_elems = max(1, total_budget // per_elem)

    # Native sublane pack of the streamed dtype: f32 -> 8, bf16 -> 16, i8/fp8 -> 32.
    sub = max(8, 32 // dtype_bytes)

    # Vocab tile: full vocab if it fits under the cap, else a 128-multiple cap.
    tv_cap = 8192 if dtype_bytes <= 2 else 4096
    tv = V if V <= tv_cap else tv_cap

    # Row tile: as large as the budget allows, capped, rounded to the sublane pack.
    tm = min(1024, max(sub, max_tile_elems // max(tv, 1)))
    tm = max(sub, (tm // sub) * sub)

    if M >= 2 * sub and M <= tm:
        # Guarantee >= 2 row blocks so the "parallel" row axis can shard across
        # v7x's 2 TensorCores (harmless on single-TC chips).
        tm = max(sub, ((M // 2) // sub) * sub)
    elif M < tm:
        tm = M if M < sub else (M // sub) * sub

    return tm, tv, vmem_limit


def ce_loss_pallas(logits, target, *, voc_size: int, pad_token: int,
                   tm: int | None = None, tv: int | None = None):
    """logits: [L-1, B, V] (any float dtype); target: [L-1, B] int.
    Returns scalar f32 sum-CE with ignore_index=pad_token."""
    V = voc_size
    x = logits.reshape(-1, V)                   # native dtype, no upcast, no pad copy
    t = target.reshape(-1).astype(jnp.int32)    # (M,)
    M = x.shape[0]

    dtype_bytes = jnp.dtype(x.dtype).itemsize
    tm_sel, tv_sel, vmem_limit = _pick_tiles(M, V, dtype_bytes)
    if tm is not None:
        tm_sel = tm
    if tv is not None:
        tv_sel = tv
    # BlockSpec constraint: last two dims divisible by (8, 128) or equal full dims.
    assert tm_sel == M or tm_sel % 8 == 0, f"tm={tm_sel} must be a multiple of 8 or == M"
    assert tv_sel == V or tv_sel % 128 == 0, f"tv={tv_sel} must be a multiple of 128 or == V"

    grid = (pl.cdiv(M, tm_sel), pl.cdiv(V, tv_sel))   # reduction (vocab) axis last

    lse = pl.pallas_call(
        functools.partial(_lse_kernel, V=V, tv=tv_sel),
        out_shape=jax.ShapeDtypeStruct((M, 1), jnp.float32),
        grid_spec=pltpu.PrefetchScalarGridSpec(
            num_scalar_prefetch=0,
            grid=grid,
            in_specs=[
                pl.BlockSpec((tm_sel, tv_sel), lambda i, j: (i, j)),
            ],
            out_specs=pl.BlockSpec((tm_sel, 1), lambda i, j: (i, 0)),
            scratch_shapes=[
                pltpu.VMEM((tm_sel, 1), jnp.float32),   # running max
                pltpu.VMEM((tm_sel, 1), jnp.float32),   # running sum of exp
            ],
        ),
        compiler_params=pltpu.CompilerParams(
            # Row blocks independent -> "parallel" (shards across v7x's 2 TCs);
            # vocab axis is the reduction -> "arbitrary".
            dimension_semantics=("parallel", "arbitrary"),
            vmem_limit_bytes=vmem_limit,
        ),
    )(x)[:, 0]

    # Target-logit gather + ignore_index handled outside the hot loop:
    # an M-element gather on HBM is negligible next to the M*V logits stream.
    t_safe = jnp.clip(t, 0, V - 1)
    picked = jnp.take_along_axis(x, t_safe[:, None], axis=-1)[:, 0].astype(jnp.float32)
    loss = lse - picked
    return jnp.sum(jnp.where(t != pad_token, loss, 0.0))


def ce_loss_ref(logits, target, *, voc_size: int, pad_token: int):
    """Pure-JAX reference mirroring F.cross_entropy(..., reduction='sum', ignore_index=pad)."""
    x = logits.reshape(-1, voc_size).astype(jnp.float32)
    t = target.reshape(-1).astype(jnp.int32)
    lse = jax.nn.logsumexp(x, axis=-1)
    picked = jnp.take_along_axis(x, t[:, None], axis=-1)[:, 0]
    loss = lse - picked
    return jnp.sum(jnp.where(t != pad_token, loss, 0.0))


if __name__ == "__main__":
    PAD_TOKEN = 0
    key = jax.random.PRNGKey(0)
    k1l, k1t, k2l, k2t, k3l, k3t = jax.random.split(key, 6)

    # --- Test 1: module-consistent shapes: input [L-1, B, N], target [L-1, B] (f32)
    Lm1, B, V = 8, 2, 128
    logits = jax.random.normal(k1l, (Lm1, B, V), dtype=jnp.float32)
    target = jax.random.randint(k1t, (Lm1, B), 0, V, dtype=jnp.int32)
    target = target.at[0, 0].set(PAD_TOKEN).at[3, 1].set(PAD_TOKEN)  # exercise ignore_index

    out = jax.block_until_ready(ce_loss_pallas(logits, target, voc_size=V, pad_token=PAD_TOKEN))
    ref = ce_loss_ref(logits, target, voc_size=V, pad_token=PAD_TOKEN)
    assert jnp.allclose(out, ref, rtol=1e-5, atol=1e-4), (out, ref)

    # --- Test 2: ragged row count (M=15), bf16 streaming dtype.
    Lm1b, Bb, Vb = 5, 3, 256
    logits_b = jax.random.normal(k2l, (Lm1b, Bb, Vb), dtype=jnp.bfloat16)
    target_b = jax.random.randint(k2t, (Lm1b, Bb), 0, Vb, dtype=jnp.int32)
    target_b = target_b.at[1, 2].set(PAD_TOKEN)

    out_b = jax.block_until_ready(ce_loss_pallas(logits_b, target_b, voc_size=Vb, pad_token=PAD_TOKEN))
    ref_b = ce_loss_ref(logits_b, target_b, voc_size=Vb, pad_token=PAD_TOKEN)
    assert jnp.allclose(out_b, ref_b, rtol=1e-3, atol=1e-2), (out_b, ref_b)

    # --- Test 3: multi-block vocab with ragged vocab tail (tv override) + ragged row tail.
    Lm1c, Bc, Vc = 5, 8, 300       # M = 40, V not a multiple of 128
    logits_c = jax.random.normal(k3l, (Lm1c, Bc, Vc), dtype=jnp.float32)
    target_c = jax.random.randint(k3t, (Lm1c, Bc), 0, Vc, dtype=jnp.int32)
    target_c = target_c.at[2, 5].set(PAD_TOKEN)

    out_c = jax.block_until_ready(
        ce_loss_pallas(logits_c, target_c, voc_size=Vc, pad_token=PAD_TOKEN, tv=128))
    ref_c = ce_loss_ref(logits_c, target_c, voc_size=Vc, pad_token=PAD_TOKEN)
    assert jnp.allclose(out_c, ref_c, rtol=1e-5, atol=1e-4), (out_c, ref_c)

    # TODO(synk): the PyTorch module's logging of decoded targets for the first
    # 5 steps (VocEncoder.decode + np.random sampling) is a host-side side effect
    # only, not part of the numeric forward pass; omitted.
    print("KERNEL_OK")
</pallas_src>

<mosaic_0001>
module attributes {stable_mosaic.version = 11 : i64} {
  func.func @_lse_kernel(%arg0: i32, %arg1: i32, %arg2: memref<8x128xf32, #tpu.memory_space<vmem>>, %arg3: memref<8x1xf32, #tpu.memory_space<vmem>>, %arg4: memref<8x1xf32, #tpu.memory_space<vmem>>, %arg5: memref<8x1xf32, #tpu.memory_space<vmem>>) attributes {dimension_semantics = [#tpu.dimension_semantics<parallel>, #tpu.dimension_semantics<arbitrary>], iteration_bounds = array<i64: 2, 1>, scalar_prefetch = 0 : i64, scratch_operands = 2 : i64, tpu.core_type = #tpu.core_type<tc>, window_params = [{transform_indices = @transform_0, window_bounds = array<i64: 8, 128>}, {transform_indices = @transform_1, window_bounds = array<i64: 8, 1>}]} {
    %c0_i32 = arith.constant 0 : i32
    %0 = arith.cmpi eq, %arg1, %c0_i32 : i32
    %1 = arith.extui %0 : i1 to i32
    %c0_i32_0 = arith.constant 0 : i32
    %2 = arith.cmpi ne, %1, %c0_i32_0 : i32
    scf.if %2 {
      %cst_15 = arith.constant 0xFF800000 : f32
      %24 = vector.broadcast %cst_15 : f32 to vector<8x1xf32>
      %c0_16 = arith.constant 0 : index
      %c0_17 = arith.constant 0 : index
      %25 = vector.load %arg4[%c0_16, %c0_17] : memref<8x1xf32, #tpu.memory_space<vmem>>, vector<8x1xf32>
      tpu.vector_store %arg4[%c0_16, %c0_17], %24 {strides = array<i32>} : memref<8x1xf32, #tpu.memory_space<vmem>>, vector<8x1xf32>,
      %cst_18 = arith.constant 0.000000e+00 : f32
      %26 = vector.broadcast %cst_18 : f32 to vector<8x1xf32>
      %c0_19 = arith.constant 0 : index
      %c0_20 = arith.constant 0 : index
      %27 = vector.load %arg5[%c0_19, %c0_20] : memref<8x1xf32, #tpu.memory_space<vmem>>, vector<8x1xf32>
      tpu.vector_store %arg5[%c0_19, %c0_20], %26 {strides = array<i32>} : memref<8x1xf32, #tpu.memory_space<vmem>>, vector<8x1xf32>,
    } else {
    }
    %c0 = arith.constant 0 : index
    %c0_1 = arith.constant 0 : index
    %3 = vector.load %arg2[%c0, %c0_1] : memref<8x128xf32, #tpu.memory_space<vmem>>, vector<8x128xf32>
    %cst = arith.constant dense<0xFF800000> : vector<8xf32>
    %4 = vector.multi_reduction <maximumf>, %3, %cst [1] : vector<8x128xf32> to vector<8xf32>
    %5 = vector.shape_cast %4 : vector<8xf32> to vector<8x1xf32>
    %c0_2 = arith.constant 0 : index
    %c0_3 = arith.constant 0 : index
    %6 = vector.load %arg4[%c0_2, %c0_3] : memref<8x1xf32, #tpu.memory_space<vmem>>, vector<8x1xf32>
    %7 = arith.maximumf %6, %5 : vector<8x1xf32>
    %8 = vector.broadcast %7 : vector<8x1xf32> to vector<8x128xf32>
    %9 = arith.subf %3, %8 : vector<8x128xf32>
    %10 = math.exp %9 : vector<8x128xf32>
    %c0_4 = arith.constant 0 : index
    %c0_5 = arith.constant 0 : index
    %11 = vector.load %arg4[%c0_4, %c0_5] : memref<8x1xf32, #tpu.memory_space<vmem>>, vector<8x1xf32>
    %12 = arith.subf %11, %7 : vector<8x1xf32>
    %13 = math.exp %12 : vector<8x1xf32>
    %c0_6 = arith.constant 0 : index
    %c0_7 = arith.constant 0 : index
    %14 = vector.load %arg5[%c0_6, %c0_7] : memref<8x1xf32, #tpu.memory_space<vmem>>, vector<8x1xf32>
    %15 = arith.mulf %13, %14 : vector<8x1xf32>
    %cst_8 = arith.constant dense<0.000000e+00> : vector<8xf32>
    %16 = vector.multi_reduction <add>, %10, %cst_8 [1] : vector<8x128xf32> to vector<8xf32>
    %17 = vector.shape_cast %16 : vector<8xf32> to vector<8x1xf32>
    %18 = arith.addf %15, %17 : vector<8x1xf32>
    %c0_9 = arith.constant 0 : index
    %c0_10 = arith.constant 0 : index
    %19 = vector.load %arg5[%c0_9, %c0_10] : memref<8x1xf32, #tpu.memory_space<vmem>>, vector<8x1xf32>
    tpu.vector_store %arg5[%c0_9, %c0_10], %18 {strides = array<i32>} : memref<8x1xf32, #tpu.memory_space<vmem>>, vector<8x1xf32>,
    %c0_11 = arith.constant 0 : index
    %c0_12 = arith.constant 0 : index
    %20 = vector.load %arg4[%c0_11, %c0_12] : memref<8x1xf32, #tpu.memory_space<vmem>>, vector<8x1xf32>
    tpu.vector_store %arg4[%c0_11, %c0_12], %7 {strides = array<i32>} : memref<8x1xf32, #tpu.memory_space<vmem>>, vector<8x1xf32>,
    %c0_i32_13 = arith.constant 0 : i32
    %21 = arith.cmpi eq, %arg1, %c0_i32_13 : i32
    %22 = arith.extui %21 : i1 to i32
    %c0_i32_14 = arith.constant 0 : i32
    %23 = arith.cmpi ne, %22, %c0_i32_14 : i32
    scf.if %23 {
      %c0_15 = arith.constant 0 : index
      %c0_16 = arith.constant 0 : index
      %24 = vector.load %arg4[%c0_15, %c0_16] : memref<8x1xf32, #tpu.memory_space<vmem>>, vector<8x1xf32>
      %c0_17 = arith.constant 0 : index
      %c0_18 = arith.constant 0 : index
      %25 = vector.load %arg5[%c0_17, %c0_18] : memref<8x1xf32, #tpu.memory_space<vmem>>, vector<8x1xf32>
      %26 = math.log %25 : vector<8x1xf32>
      %27 = arith.addf %24, %26 : vector<8x1xf32>
      %c0_19 = arith.constant 0 : index
      %c0_20 = arith.constant 0 : index
      %28 = vector.load %arg3[%c0_19, %c0_20] : memref<8x1xf32, #tpu.memory_space<vmem>>, vector<8x1xf32>
      tpu.vector_store %arg3[%c0_19, %c0_20], %27 {strides = array<i32>} : memref<8x1xf32, #tpu.memory_space<vmem>>, vector<8x1xf32>,
    } else {
    }
    return
  }
  func.func @transform_0(%arg0: i32, %arg1: i32) -> (i32, i32) {
    %c0_i32 = arith.constant 0 : i32
    return %arg0, %arg1 : i32, i32
  }
  func.func @transform_1(%arg0: i32, %arg1: i32) -> (i32, i32) {
    %c0_i32 = arith.constant 0 : i32
    %c0_i32_0 = arith.constant 0 : i32
    return %arg0, %c0_i32 : i32, i32
  }
}

</mosaic_0001>

<llo_original>
// kernel: tpu_custom_call.1
$region0: #{tpu_custom_call.1}
  #allocation0 [shape = 'u32[]', space=smem, size = 0x4, offset = 0x4, fixed_abs, tag = 'smem constant byte address 0x4 - core index']
  #allocation1 [shape = 'u32[144,128]{1,0:T(1,128)}', space=vmem, size = 0x12000, scoped, tag = 'internal scratch']
  #allocation2 [shape = 'f32[8,1]{1,0:T(8,128)}', space=vmem, size = 0x1000, scoped, tag = 'scratch operand']
  #allocation3 [shape = 'f32[8,1]{1,0:T(8,128)}', space=vmem, size = 0x1000, scoped, tag = 'scratch operand']
  %s0 = inlined_call_operand.hbm [shape: f32[16,128], index: 0, kind: input, shape index: {}]
  %s1 = inlined_call_operand.vmem [shape: f32[16,1], index: 1, kind: output, shape index: {}]
  %s2 = sld [smem:[#allocation0]]
  $region49: #{tpu_custom_call.1} parent=0
    _
  %s4 = ssub.s32 1, %s2
  %s5 = scalar_select 0, %s4, %s2
  $region1: #{tpu_custom_call.1} parent=0
    #allocation4 [shape = 'u8[8192]{0}', space=vmem, size = 0x2000, scoped, tag = 'input window, operand 0']
    #allocation5 [shape = 's32[2]{0}', space=sflag, size = 0x8, scoped, tag = 'scoped memory for tpu_custom_call.1']
    %6 = vsyncpa [#allocation5], 0
    %s7 = scalar_lea.sflag [#allocation5], 1
    %8 = vsyncpa %s7, 0
    loop: start=0, step=1, limit=4
    $region2: #{tpu_custom_call.1} parent=1 // loop_pre_header
      _
    $region3: #{tpu_custom_call.1} parent=1 // loop_header
      %s10 = sphi 0, %s14
      %p11 = scmp.ge.s32.totalorder %s10, 4
      %s17 = sphi 0, %s29
      %s18 = sphi 0, %s25
      %s19 = sphi 0, %s17
      %s20 = sphi 0, %s18
      %s21 = sphi 0, %s19
      %s22 = sphi 0, %s20
      %s34 = sphi 0, %s36
      %s37 = sphi 0, %s34
      %s38 = sphi 0, %s37
      %s54 = sphi 0, %s38
      %s60 = sphi 0, %s62
      %s63 = sphi 0, %s60
      %s64 = sphi 0, %s63
      %s80 = sphi 0, %s64
    $region4: #{tpu_custom_call.1} parent=1 // loop_header_branch
      %13 = sbr.rel (%p11) target = $region8
    $region5: #{tpu_custom_call.1} parent=1 // loop_body
      %s15 = ssub.s32 %s10, 1
      %s16 = ssub.s32 %s10, 2
      %s23 = sadd.s32 1, %s18
      %p24 = scmp.ge.s32.totalorder %s23, 1
      %s25 = scalar_select %p24, 0, %s23
      %s26 = sadd.s32 1, %s17
      %s27 = scalar_select %p24, %s26, %s17
      %p28 = scmp.ge.s32.totalorder %s27, 2
      %s29 = scalar_select %p28, 0, %s27
      %s30 = ssub.s32 %s17, %s29
      %s31 = ssub.s32 %s18, %s25
      %s32 = sor.u32 %s30, %s31
      %p33 = scmp.eq.s32.totalorder %s32, 0
      %s35 = sadd.s32 %s34, 1
      %s36 = scalar_select %p33, %s34, %s35
      %p39 = pneg %p33
      %p40 = scmp.eq.s32.totalorder %s10, 1
      %p41 = por %p39, %p40
      %p42 = scmp.ne.s32.totalorder %s34, %s37
      %p43 = scmp.eq.s32.totalorder %s10, 0
      %p44 = por %p42, %p43
      %p45 = scmp.ne.s32.totalorder %s34, %s37
      %p46 = scmp.eq.s32.totalorder %s15, 1
      %p47 = por %p45, %p46
      %p48 = scmp.ne.s32.totalorder %s37, %s38
      %p49 = scmp.eq.s32.totalorder %s15, 0
      %p50 = por %p48, %p49
      %p51 = scmp.ne.s32.totalorder %s37, %s38
      %p52 = scmp.eq.s32.totalorder %s16, 1
      %p53 = por %p51, %p52
      %p55 = scmp.ne.s32.totalorder %s38, %s54
      %p56 = scmp.eq.s32.totalorder %s16, 0
      %p57 = por %p55, %p56
      %s58 = ssub.s32 %s17, %s29
      %p59 = scmp.eq.s32.totalorder %s58, 0
      %s61 = sadd.s32 %s60, 1
      %s62 = scalar_select %p59, %s60, %s61
      %p65 = pneg %p59
      %p66 = scmp.eq.s32.totalorder %s10, 1
      %p67 = por %p65, %p66
      %p68 = scmp.ne.s32.totalorder %s60, %s63
      %p69 = scmp.eq.s32.totalorder %s10, 0
      %p70 = por %p68, %p69
      %p71 = scmp.ne.s32.totalorder %s60, %s63
      %p72 = scmp.eq.s32.totalorder %s15, 1
      %p73 = por %p71, %p72
      %p74 = scmp.ne.s32.totalorder %s63, %s64
      %p75 = scmp.eq.s32.totalorder %s15, 0
      %p76 = por %p74, %p75
      %p77 = scmp.ne.s32.totalorder %s63, %s64
      %p78 = scmp.eq.s32.totalorder %s16, 1
      %p79 = por %p77, %p78
      %p81 = scmp.ne.s32.totalorder %s64, %s80
      %p82 = scmp.eq.s32.totalorder %s16, 0
      %p83 = por %p81, %p82
      %p84 = scmp.le.s32.totalorder 1, %s10
      %p85 = scmp.lt.s32.totalorder %s10, 3
      %p86 = pnand %p84, %p85
      %p87 = pneg %p86
      // Predicated region
      $region9: #{tpu_custom_call.1} parent=5 // pred_check
        _
      $region10: #{tpu_custom_call.1} parent=5 // pred_check_branch
        %89 = sbr.rel (%p86) target = $region12
      $region11: #{tpu_custom_call.1} parent=5 // pred_region
        %s90 = ssub.s32 %s10, 1
      $region12: #{tpu_custom_call.1} parent=5 // pred_fallthru
        _
      %p91 = scmp.lt.s32.totalorder %s10, 2
      // Predicated region
      $region13: #{tpu_custom_call.1} parent=5 // pred_check
        %p92 = pneg %p91
      $region14: #{tpu_custom_call.1} parent=5 // pred_check_branch
        %94 = sbr.rel (%p92) target = $region16
      $region15: #{tpu_custom_call.1} parent=5 // pred_region
        // Predicated region
        $region17: #{tpu_custom_call.1} parent=15 // pred_check
          %p95 = pneg %p44
        $region18: #{tpu_custom_call.1} parent=15 // pred_check_branch
          %97 = sbr.rel (%p95) target = $region20
        $region19: #{tpu_custom_call.1} parent=15 // pred_region
          %s98 = sand.u32 %s34, 1
          %s99 = scalar_lea.sflag [#allocation5], %s98
          %s100 = sand.u32 %s34, 1
          %s101 = smul.addr %s100, 8
          %s102 = scalar_lea.vmem [#allocation4], %s101
          %s104 = ssub.s32 128, 128
          %105 = vsyncadd %s99, %s104
          %s106 = sadd.s32 %s18, %s17
          %s107 = smul.addr %s106, 128
          %s108 = scalar_lea.hbm %s0, %s107
          %s110 = sshll.u32 %s102, 4
          %s111 = int_to_ptr.vmem [resolvable:$true] %s110
          %113 = dma.hbm_to_vmem [thread:$0]  %s108, 128, %s111, %s99
        $region20: #{tpu_custom_call.1} parent=15 // pred_fallthru
          _
      $region16: #{tpu_custom_call.1} parent=5 // pred_fallthru
        _
      %p114 = scmp.le.s32.totalorder 1, %s10
      %p115 = scmp.lt.s32.totalorder %s10, 3
      %p116 = pnand %p114, %p115
      %p117 = pneg %p116
      // Predicated region
      $region21: #{tpu_custom_call.1} parent=5 // pred_check
        _
      $region22: #{tpu_custom_call.1} parent=5 // pred_check_branch
        %119 = sbr.rel (%p116) target = $region24
      $region23: #{tpu_custom_call.1} parent=5 // pred_region
        %s120 = ssub.s32 %s10, 1
        %s121 = sand.u32 %s37, 1
        %s122 = scalar_lea.sflag [#allocation5], %s121
        %s123 = sand.u32 %s37, 1
        %s124 = smul.addr %s123, 8
        %s125 = scalar_lea.vmem [#allocation4], %s124
        // Predicated region
        $region25: #{tpu_custom_call.1} parent=23 // pred_check
          %p126 = pneg %p50
        $region26: #{tpu_custom_call.1} parent=23 // pred_check_branch
          %128 = sbr.rel (%p126) target = $region28
        $region27: #{tpu_custom_call.1} parent=23 // pred_region
          %129 = dma.done %s122, 128
        $region28: #{tpu_custom_call.1} parent=23 // pred_fallthru
          _
        %s130 = sand.u32 %s37, 1
        %s131 = scalar_lea.sflag [#allocation5], %s130
        %s132 = sand.u32 %s37, 1
        %s133 = smul.addr %s132, 8
        %s134 = scalar_lea.vmem [#allocation4], %s133
        %p135 = pneg %p50
        %p136 = pneg %p47
        %p137 = pneg %p76
        %p138 = pneg %p73
        %p139 = scmp.lt.s32.totalorder %s19, 1
        %s140 = scalar_select %p139, %s19, 1
        %s141 = smul.addr %s140, 8
        %s142 = scalar_lea.vmem %s1, %s141
        %p143 = scmp.lt.s32.totalorder %s19, 1
        %s144 = scalar_select %p143, %s19, 1
        %s145 = smul.addr %s144, 8
        %s146 = scalar_lea.vmem %s1, %s145
        %p147 = scmp.eq.s32.totalorder %s20, 0
        // Predicated region
        $region29: #{tpu_custom_call.1} parent=23 // pred_check
          %p148 = pneg %p147
        $region30: #{tpu_custom_call.1} parent=23 // pred_check_branch
          %150 = sbr.rel (%p148) target = $region32
        $region31: #{tpu_custom_call.1} parent=23 // pred_region
          %vm151 = vcmask 7168
          %152 = vst.msk [vmem:[#allocation2] sm:$0xff] %vm151, -inf
          %153 = vst.msk [vmem:[#allocation3] sm:$0xff] %vm151, 0.0
        $region32: #{tpu_custom_call.1} parent=23 // pred_fallthru
          _
        %v154 = vld [vmem:[%s125] sm:$0xff]
        %155 = vmax.xlane.f32.xlu0 %v154
        %v156 = vpop.xlane.xlu0 %155
        %v157 = vld [vmem:[#allocation2] sm:$0xff]
        %v158 = vmax.f32 %v157, %v156
        %160 = vset.pattern.permute.xlu0 0
        %161 = vperm.xlu0 %160, %v158
        %v162 = vpop.permute.xlu0 %161
        %v164 = vsub.f32 %v154, %v162
        %v165 = vmul.f32 %v164, 1.442695
        %v166 = vpow.pop %v165
        %v167 = vsub.f32 %v157, %v158
        %v168 = vmul.f32 %v167, 1.442695
        %v169 = vpow.pop %v168
        %v170 = vld [vmem:[#allocation3] sm:$0xff]
        %v171 = vmul.f32 %v169, %v170
        %172 = vadd.xlane.f32.xlu0 %v166
        %v173 = vpop.xlane.xlu0 %172
        %v174 = vadd.f32 %v171, %v173
        %vm175 = vcmask 7168
        %176 = vst.msk [vmem:[#allocation3] sm:$0xff] %vm175, %v174
        %177 = vst.msk [vmem:[#allocation2] sm:$0xff] %vm175, %v158
        // Predicated region
        $region33: #{tpu_custom_call.1} parent=23 // pred_check
          %p178 = pneg %p147
        $region34: #{tpu_custom_call.1} parent=23 // pred_check_branch
          %180 = sbr.rel (%p178) target = $region36
        $region35: #{tpu_custom_call.1} parent=23 // pred_region
          %v181 = vld [vmem:[#allocation2] sm:$0xff]
          %v182 = vld [vmem:[#allocation3] sm:$0xff]
          %v183 = vlog2.pop %v182
          %v184 = vmul.f32 %v183, 0.6931472
          %v185 = vadd.f32 %v181, %v184
          %186 = vst.msk [vmem:[%s146] sm:$0xff] %vm175, %v185
        $region36: #{tpu_custom_call.1} parent=23 // pred_fallthru
          _
        %p187 = scmp.lt.s32.totalorder %s19, 1
        %s188 = scalar_select %p187, %s19, 1
        %s189 = smul.addr %s188, 8
        %s190 = scalar_lea.vmem %s1, %s189
        // Predicated region
        $region37: #{tpu_custom_call.1} parent=23 // pred_check
          %p191 = pneg %p73
        $region38: #{tpu_custom_call.1} parent=23 // pred_check_branch
          %193 = sbr.rel (%p191) target = $region40
        $region39: #{tpu_custom_call.1} parent=23 // pred_region
          _
        $region40: #{tpu_custom_call.1} parent=23 // pred_fallthru
          _
      $region24: #{tpu_custom_call.1} parent=5 // pred_fallthru
        _
      %p194 = scmp.le.s32.totalorder 2, %s10
      // Predicated region
      $region41: #{tpu_custom_call.1} parent=5 // pred_check
        %p195 = pneg %p194
      $region42: #{tpu_custom_call.1} parent=5 // pred_check_branch
        %197 = sbr.rel (%p195) target = $region44
      $region43: #{tpu_custom_call.1} parent=5 // pred_region
        %s198 = ssub.s32 %s10, 2
        // Predicated region
        $region45: #{tpu_custom_call.1} parent=43 // pred_check
          %p199 = pneg %p79
        $region46: #{tpu_custom_call.1} parent=43 // pred_check_branch
          %201 = sbr.rel (%p199) target = $region48
        $region47: #{tpu_custom_call.1} parent=43 // pred_region
          %p202 = scmp.lt.s32.totalorder %s21, 1
          %s203 = scalar_select %p202, %s21, 1
          %s204 = smul.addr %s203, 8
          %s205 = scalar_lea.vmem %s1, %s204
        $region48: #{tpu_custom_call.1} parent=43 // pred_fallthru
          _
      $region44: #{tpu_custom_call.1} parent=5 // pred_fallthru
        _
    $region6: #{tpu_custom_call.1} parent=1 // loop_footer
      %s14 = sadd.s32 1, %s10
    $region7: #{tpu_custom_call.1} parent=1 // loop_footer_branch
      %9 = sbr.rel target = $region3
    $region8: #{tpu_custom_call.1} parent=1 // loop_exit
      _
    %206 = vsyncpa [#allocation5], 1
    %s207 = scalar_lea.sflag [#allocation5], 1
    %208 = vsyncpa %s207, 1

</llo_original>
